<compile_context>
chip_gen: v7x
topology: tpu7x:2x2x1
jax: 0.10.0
libtpu: 0.0.40
codegen_flags: <defaults>
</compile_context>

<pallas_src>
import functools
import math

import jax
import jax.numpy as jnp
from jax.experimental import pallas as pl
from jax.experimental.pallas import tpu as pltpu


def _cdiv(a: int, b: int) -> int:
    return -(-a // b)


def _round_up(x: int, m: int) -> int:
    return _cdiv(x, m) * m


def _largest_divisor_tile(full: int, cap: int, mult: int) -> int:
    """Largest tile <= cap dividing `full`, preferring multiples of `mult`, then 128."""
    if full <= cap:
        return full
    for m in (mult, 128, 8, 1):
        t = (cap // m) * m
        while t >= m:
            if full % t == 0:
                return t
            t -= m
    return full


def _equal_linear_kernel(*refs, lr_mul, has_bias, single_k):
    """One (M-tile, N-tile) output block; optionally accumulated over K tiles."""
    if has_bias:
        x_ref, w_ref, b_ref = refs[0], refs[1], refs[2]
        o_ref = refs[3]
        acc_ref = None if single_k else refs[4]
    else:
        x_ref, w_ref = refs[0], refs[1]
        b_ref = None
        o_ref = refs[2]
        acc_ref = None if single_k else refs[3]

    def epilogue(acc_f32):
        if has_bias:
            acc_f32 = acc_f32 + b_ref[...].astype(jnp.float32)   # (1, tn) broadcasts
        # (x @ (W*lr)^T + bias*lr) == (x @ W^T + bias) * lr
        o_ref[...] = (acc_f32 * lr_mul).astype(o_ref.dtype)

    if single_k:
        # Whole reduction in one K block: no scratch, no zero-init, no RMW.
        epilogue(jnp.dot(x_ref[...], w_ref[...],
                         preferred_element_type=jnp.float32))
    else:
        k = pl.program_id(2)

        @pl.when(k == 0)
        def _():
            acc_ref[...] = jnp.zeros_like(acc_ref)

        acc_ref[...] += jnp.dot(x_ref[...], w_ref[...],
                                preferred_element_type=jnp.float32)

        @pl.when(k == pl.num_programs(2) - 1)
        def _():
            epilogue(acc_ref[...])


def equal_linear(x, weight, bias=None, lr_mul=1.0, *, use_bf16_operands=True):
    """x: (..., dim), weight: (dim_out, dim), bias: (dim_out,) -> (..., dim_out)."""
    *lead, dim = x.shape
    dim_out, dim_w = weight.shape
    assert dim == dim_w, "weight last dim must match input last dim"

    out_dtype = x.dtype
    # Feed the MXU bf16 operands; accumulation stays f32 in the kernel.
    cdt = jnp.bfloat16 if (use_bf16_operands and x.dtype == jnp.float32) else x.dtype
    c_item = jnp.dtype(cdt).itemsize
    o_item = jnp.dtype(out_dtype).itemsize
    sub_mult = 16 if c_item == 2 else (32 if c_item == 1 else 8)   # sublane packing

    M = math.prod(lead) if lead else 1

    # ---- generation-aware VMEM budget ---------------------------------------
    try:
        vmem_cap = int(pltpu.get_tpu_info().vmem_capacity_bytes)
    except Exception:
        vmem_cap = 64 * 1024 * 1024                      # conservative (v7x per-TC)
    vmem_limit = min(vmem_cap * 3 // 4, 96 * 1024 * 1024)
    tile_budget = int(vmem_limit * 0.8)                  # headroom for compiler scratch

    # ---- N / K tiles ---------------------------------------------------------
    w_bytes_full = 2 * dim * dim_out * c_item            # double-buffered full weight
    if w_bytes_full <= tile_budget // 2:
        # Weight VMEM-resident: constant block index -> DMA'd once, reused for
        # every M tile (no re-streaming from HBM).
        tn, tk = dim_out, dim
    else:
        tn = _largest_divisor_tile(dim_out, 512, 256)    # v6e/v7x MXU is 256 wide
        tk = _largest_divisor_tile(dim, 1024, 256)

    single_k = (tk == dim)

    # ---- M tile from the remaining budget ------------------------------------
    w_blk_bytes = 2 * tk * tn * c_item
    per_row = 2 * tk * c_item + 2 * tn * o_item + (0 if single_k else tn * 4)
    tm_cap = max(sub_mult, (tile_budget - w_blk_bytes) // max(per_row, 1))
    tm_cap = max(sub_mult, min(512, (tm_cap // sub_mult) * sub_mult))

    # Pad-waste-aware: split M into n tiles first, then size the tile, so a
    # value of M just above the cap does not double the padded work.
    n_m_tiles = _cdiv(M, tm_cap)
    tm = _round_up(_cdiv(M, n_m_tiles), sub_mult)
    Mp = n_m_tiles * tm

    # v7x has 2 TensorCores sharded over "parallel" axes: ensure >= 2 parallel
    # iterations when the shape allows it without breaking sublane packing.
    if (Mp // tm) * (dim_out // tn) == 1 and tm % (2 * sub_mult) == 0:
        tm //= 2

    grid = (Mp // tm, dim_out // tn, dim // tk)

    # ---- operands -------------------------------------------------------------
    x2 = x.reshape(M, dim).astype(cdt)
    if Mp != M:
        x2 = jnp.pad(x2, ((0, Mp - M), (0, 0)))
    # One-time layout plumbing: (dim, dim_out) RHS is lane-dense in N and the
    # kernel contraction is a plain (tm,tk)@(tk,tn) with no in-kernel transpose.
    w_t = weight.astype(cdt).T

    has_bias = bias is not None
    inputs = [x2, w_t]
    in_specs = [
        pl.BlockSpec((tm, tk), lambda i, j, k: (i, k)),   # x
        pl.BlockSpec((tk, tn), lambda i, j, k: (k, j)),   # weight^T (resident if 1 block)
    ]
    if has_bias:
        inputs.append(bias.reshape(1, dim_out))
        in_specs.append(pl.BlockSpec((1, tn), lambda i, j, k: (0, j)))

    kernel = functools.partial(_equal_linear_kernel, lr_mul=float(lr_mul),
                               has_bias=has_bias, single_k=single_k)

    flops = 2 * Mp * dim * dim_out
    bytes_accessed = (x2.size * c_item + w_t.size * c_item + Mp * dim_out * o_item
                      + (dim_out * jnp.dtype(bias.dtype).itemsize if has_bias else 0))

    out = pl.pallas_call(
        kernel,
        out_shape=jax.ShapeDtypeStruct((Mp, dim_out), out_dtype),
        grid_spec=pltpu.PrefetchScalarGridSpec(
            num_scalar_prefetch=0,
            grid=grid,
            in_specs=in_specs,
            out_specs=pl.BlockSpec((tm, tn), lambda i, j, k: (i, j)),
            scratch_shapes=([] if single_k
                            else [pltpu.VMEM((tm, tn), jnp.float32)]),
        ),
        compiler_params=pltpu.CompilerParams(
            dimension_semantics=("parallel", "parallel", "arbitrary"),
            vmem_limit_bytes=int(vmem_limit),
        ),
        cost_estimate=pl.CostEstimate(flops=flops, transcendentals=0,
                                      bytes_accessed=int(bytes_accessed)),
    )(*inputs)

    if Mp != M:
        out = out[:M]
    return out.reshape(*lead, dim_out)


def equal_linear_reference(x, weight, bias, lr_mul=1.0):
    """Plain-JAX f32 reference mirroring the PyTorch forward exactly."""
    return x @ (weight * lr_mul).T + bias * lr_mul


if __name__ == "__main__":
    key = jax.random.PRNGKey(0)
    kx, kw, kb = jax.random.split(key, 3)

    # Small shapes consistent with the module's use inside aura_sr attention
    # blocks; dim_out a multiple of 128 for lane-dense output stores.
    B, S, dim, dim_out = 2, 8, 256, 128
    lr_mul = 0.5

    x = jax.random.normal(kx, (B, S, dim), dtype=jnp.float32)
    weight = jax.random.normal(kw, (dim_out, dim), dtype=jnp.float32)
    # PyTorch init is torch.zeros(dim_out); use a nonzero bias so the bias path
    # of the kernel is actually exercised.
    bias = jax.random.normal(kb, (dim_out,), dtype=jnp.float32)

    out = jax.block_until_ready(equal_linear(x, weight, bias, lr_mul))
    assert out.shape == (B, S, dim_out)
    assert out.dtype == x.dtype

    # Matched-precision reference: bf16 operands, f32 accumulation, lr_mul
    # folded into the epilogue exactly like the kernel.
    xb = x.reshape(-1, dim).astype(jnp.bfloat16)
    wb = weight.T.astype(jnp.bfloat16)
    ref_lp = ((jnp.dot(xb, wb, preferred_element_type=jnp.float32)
               + bias[None, :]) * lr_mul).reshape(B, S, dim_out)
    assert jnp.allclose(out, ref_lp, atol=5e-3, rtol=5e-3), (
        f"mismatch vs matched-precision reference, "
        f"max abs err {jnp.max(jnp.abs(out - ref_lp))}")

    # Sanity check against the exact f32 PyTorch-semantics reference; the loose
    # tolerance accounts only for bf16 operand rounding.
    ref_f32 = equal_linear_reference(x, weight, bias, lr_mul)
    assert jnp.allclose(out, ref_f32, atol=0.5, rtol=5e-2), (
        f"mismatch vs f32 reference, max abs err {jnp.max(jnp.abs(out - ref_f32))}")

    print("KERNEL_OK")
</pallas_src>

<mosaic_0001>
module attributes {stable_mosaic.version = 11 : i64} {
  func.func @_equal_linear_kernel(%arg0: i32, %arg1: i32, %arg2: i32, %arg3: memref<16x256xbf16, #tpu.memory_space<vmem>>, %arg4: memref<256x128xbf16, #tpu.memory_space<vmem>>, %arg5: memref<1x128xf32, #tpu.memory_space<vmem>>, %arg6: memref<16x128xf32, #tpu.memory_space<vmem>>) attributes {dimension_semantics = [#tpu.dimension_semantics<parallel>, #tpu.dimension_semantics<parallel>, #tpu.dimension_semantics<arbitrary>], iteration_bounds = array<i64: 1, 1, 1>, scalar_prefetch = 0 : i64, scratch_operands = 0 : i64, tpu.core_type = #tpu.core_type<tc>, window_params = [{transform_indices = @transform_0, window_bounds = array<i64: 16, 256>}, {transform_indices = @transform_1, window_bounds = array<i64: 256, 128>}, {transform_indices = @transform_2, window_bounds = array<i64: 1, 128>}, {transform_indices = @transform_3, window_bounds = array<i64: 16, 128>}]} {
    %c0 = arith.constant 0 : index
    %c0_0 = arith.constant 0 : index
    %0 = vector.load %arg3[%c0, %c0_0] : memref<16x256xbf16, #tpu.memory_space<vmem>>, vector<16x256xbf16>
    %c0_1 = arith.constant 0 : index
    %c0_2 = arith.constant 0 : index
    %1 = vector.load %arg4[%c0_1, %c0_2] : memref<256x128xbf16, #tpu.memory_space<vmem>>, vector<256x128xbf16>
    %cst = arith.constant dense<0.000000e+00> : vector<16x128xf32>
    %2 = tpu.matmul %0, %1, %cst {dimension_numbers = #tpu.dot_dimension_numbers<[1], [0], [0], [1], [0, 0, 1, 1], [], []>} : vector<16x256xbf16>, vector<256x128xbf16>, vector<16x128xf32> -> vector<16x128xf32>
    %c0_3 = arith.constant 0 : index
    %c0_4 = arith.constant 0 : index
    %3 = vector.load %arg5[%c0_3, %c0_4] : memref<1x128xf32, #tpu.memory_space<vmem>>, vector<1x128xf32>
    %4 = vector.broadcast %3 : vector<1x128xf32> to vector<16x128xf32>
    %5 = arith.addf %2, %4 : vector<16x128xf32>
    %cst_5 = arith.constant 5.000000e-01 : f32
    %6 = vector.broadcast %cst_5 : f32 to vector<16x128xf32>
    %7 = arith.mulf %5, %6 : vector<16x128xf32>
    %c0_6 = arith.constant 0 : index
    %c0_7 = arith.constant 0 : index
    %8 = vector.load %arg6[%c0_6, %c0_7] : memref<16x128xf32, #tpu.memory_space<vmem>>, vector<16x128xf32>
    tpu.vector_store %arg6[%c0_6, %c0_7], %7 {strides = array<i32>} : memref<16x128xf32, #tpu.memory_space<vmem>>, vector<16x128xf32>,
    return
  }
  func.func @transform_0(%arg0: i32, %arg1: i32, %arg2: i32) -> (i32, i32) {
    %c0_i32 = arith.constant 0 : i32
    return %arg0, %arg2 : i32, i32
  }
  func.func @transform_1(%arg0: i32, %arg1: i32, %arg2: i32) -> (i32, i32) {
    %c0_i32 = arith.constant 0 : i32
    return %arg2, %arg1 : i32, i32
  }
  func.func @transform_2(%arg0: i32, %arg1: i32, %arg2: i32) -> (i32, i32) {
    %c0_i32 = arith.constant 0 : i32
    %c0_i32_0 = arith.constant 0 : i32
    return %c0_i32, %arg1 : i32, i32
  }
  func.func @transform_3(%arg0: i32, %arg1: i32, %arg2: i32) -> (i32, i32) {
    %c0_i32 = arith.constant 0 : i32
    return %arg0, %arg1 : i32, i32
  }
}

</mosaic_0001>

<llo_original>
// kernel: tpu_custom_call.1
$region0: #{tpu_custom_call.1}
  #allocation0 [shape = 'u32[]', space=smem, size = 0x4, offset = 0x4, fixed_abs, tag = 'smem constant byte address 0x4 - core index']
  #allocation1 [shape = 'u32[144,128]{1,0:T(1,128)}', space=vmem, size = 0x12000, scoped, tag = 'internal scratch']
  %s0 = inlined_call_operand.hbm [shape: bf16[16,256], index: 0, kind: input, shape index: {}]
  %s1 = inlined_call_operand.hbm [shape: bf16[256,128], index: 1, kind: input, shape index: {}]
  %s2 = inlined_call_operand.vmem [shape: f32[1,128], index: 2, kind: input, shape index: {}]
  %s3 = inlined_call_operand.hbm [shape: f32[16,128], index: 3, kind: output, shape index: {}]
  %s4 = sld [smem:[#allocation0]]
  $region30: #{tpu_custom_call.1} parent=0
    _
  %s6 = ssub.s32 1, %s4
  %s7 = scalar_select 0, %s6, %s4
  $region1: #{tpu_custom_call.1} parent=0
    #allocation2 [shape = 'u8[8192]{0}', space=vmem, size = 0x2000, scoped, tag = 'input window, operand 0, single buffered']
    #allocation3 [shape = 's32[1]{0}', space=sflag, size = 0x4, scoped, tag = 'scoped memory for tpu_custom_call.1']
    #allocation4 [shape = 's32[1]{0}', space=sflag, size = 0x4, scoped, tag = 'scoped memory for tpu_custom_call.1']
    #allocation5 [shape = 'u8[65536]{0}', space=vmem, size = 0x10000, scoped, tag = 'input window, operand 1, single buffered']
    #allocation6 [shape = 's32[1]{0}', space=sflag, size = 0x4, scoped, tag = 'scoped memory for tpu_custom_call.1']
    #allocation7 [shape = 'u8[8192]{0}', space=vmem, size = 0x2000, scoped, tag = 'output window, operand 0, single buffered']
    %8 = vsyncpa [#allocation3], 0
    %9 = vsyncpa [#allocation6], 0
    %10 = vsyncpa [#allocation4], 0
    // Predicated region
    $region2: #{tpu_custom_call.1} parent=1 // pred_check
      _
    $region3: #{tpu_custom_call.1} parent=1 // pred_check_branch
      %12 = sbr.rel (0) target = $region5
    $region4: #{tpu_custom_call.1} parent=1 // pred_region
      %s14 = ssub.s32 256, 256
      %15 = vsyncadd [#allocation3], %s14
      %s16 = sshll.u32 [#allocation2], 4
      %s17 = int_to_ptr.vmem [resolvable:$true] %s16
      %22 = dma.hbm_to_vmem [thread:$0]  %s0, 256, %s17, [#allocation3], 128, 128, 8
    $region5: #{tpu_custom_call.1} parent=1 // pred_fallthru
      _
    // Predicated region
    $region6: #{tpu_custom_call.1} parent=1 // pred_check
      _
    $region7: #{tpu_custom_call.1} parent=1 // pred_check_branch
      %24 = sbr.rel (0) target = $region9
    $region8: #{tpu_custom_call.1} parent=1 // pred_region
      %s26 = ssub.s32 2048, 2048
      %27 = vsyncadd [#allocation6], %s26
      %s28 = sshll.u32 [#allocation5], 4
      %s29 = int_to_ptr.vmem [resolvable:$true] %s28
      %34 = dma.hbm_to_vmem [thread:$0]  %s1, 2048, %s29, [#allocation6], 64, 64, 4
    $region9: #{tpu_custom_call.1} parent=1 // pred_fallthru
      _
    // Predicated region
    $region10: #{tpu_custom_call.1} parent=1 // pred_check
      _
    $region11: #{tpu_custom_call.1} parent=1 // pred_check_branch
      %36 = sbr.rel (0) target = $region13
    $region12: #{tpu_custom_call.1} parent=1 // pred_region
      _
    $region13: #{tpu_custom_call.1} parent=1 // pred_fallthru
      _
    // Predicated region
    $region14: #{tpu_custom_call.1} parent=1 // pred_check
      _
    $region15: #{tpu_custom_call.1} parent=1 // pred_check_branch
      %38 = sbr.rel (0) target = $region17
    $region16: #{tpu_custom_call.1} parent=1 // pred_region
      %39 = dma.done [#allocation3], 256
    $region17: #{tpu_custom_call.1} parent=1 // pred_fallthru
      _
    // Predicated region
    $region18: #{tpu_custom_call.1} parent=1 // pred_check
      _
    $region19: #{tpu_custom_call.1} parent=1 // pred_check_branch
      %41 = sbr.rel (0) target = $region21
    $region20: #{tpu_custom_call.1} parent=1 // pred_region
      %42 = dma.done [#allocation6], 2048
    $region21: #{tpu_custom_call.1} parent=1 // pred_fallthru
      _
    %v44 = vld [vmem:[#allocation2] sm:$0xff]
    %v45 = vld [vmem:[#allocation2 + $0x8] sm:$0xff]
    %v46 = vld [vmem:[#allocation5] sm:$0xf]
    %v47 = vld [vmem:[#allocation5 + $0x4] sm:$0xf]
    %v48 = vld [vmem:[#allocation5 + $0x8] sm:$0xf]
    %v49 = vld [vmem:[#allocation5 + $0xc] sm:$0xf]
    %v50 = vld [vmem:[#allocation5 + $0x10] sm:$0xf]
    %v51 = vld [vmem:[#allocation5 + $0x14] sm:$0xf]
    %v52 = vld [vmem:[#allocation5 + $0x18] sm:$0xf]
    %v53 = vld [vmem:[#allocation5 + $0x1c] sm:$0xf]
    %v54 = vld [vmem:[#allocation5 + $0x20] sm:$0xf]
    %v55 = vld [vmem:[#allocation5 + $0x24] sm:$0xf]
    %v56 = vld [vmem:[#allocation5 + $0x28] sm:$0xf]
    %v57 = vld [vmem:[#allocation5 + $0x2c] sm:$0xf]
    %v58 = vld [vmem:[#allocation5 + $0x30] sm:$0xf]
    %v59 = vld [vmem:[#allocation5 + $0x34] sm:$0xf]
    %v60 = vld [vmem:[#allocation5 + $0x38] sm:$0xf]
    %v61 = vld [vmem:[#allocation5 + $0x3c] sm:$0xf]
    %v62 = vld [vmem:[#allocation5 + $0x40] sm:$0xf]
    %v63 = vld [vmem:[#allocation5 + $0x44] sm:$0xf]
    %v64 = vld [vmem:[#allocation5 + $0x48] sm:$0xf]
    %v65 = vld [vmem:[#allocation5 + $0x4c] sm:$0xf]
    %v66 = vld [vmem:[#allocation5 + $0x50] sm:$0xf]
    %v67 = vld [vmem:[#allocation5 + $0x54] sm:$0xf]
    %v68 = vld [vmem:[#allocation5 + $0x58] sm:$0xf]
    %v69 = vld [vmem:[#allocation5 + $0x5c] sm:$0xf]
    %v70 = vld [vmem:[#allocation5 + $0x60] sm:$0xf]
    %v71 = vld [vmem:[#allocation5 + $0x64] sm:$0xf]
    %v72 = vld [vmem:[#allocation5 + $0x68] sm:$0xf]
    %v73 = vld [vmem:[#allocation5 + $0x6c] sm:$0xf]
    %v74 = vld [vmem:[#allocation5 + $0x70] sm:$0xf]
    %v75 = vld [vmem:[#allocation5 + $0x74] sm:$0xf]
    %v76 = vld [vmem:[#allocation5 + $0x78] sm:$0xf]
    %v77 = vld [vmem:[#allocation5 + $0x7c] sm:$0xf]
    %v78 = vld [vmem:[%s2] sm:$0x1]
    %v80 = vlaneseq
    %v81 = vshrl.u32 %v80, 7
    %v82 = vsub.s32 0, %v81
    %v83 = vrot.slane %v78, %v82
    %v87 = vunpack.c.l.b16 %v44
    %v88 = vunpack.c.h.b16 %v44
    %v89 = vunpack.c.l.b16 %v45
    %v90 = vunpack.c.h.b16 %v45
    %v91 = vpack.c.b16 %v89, %v87
    %v92 = vpack.c.b16 %v90, %v88
    %v127 = vunpack.c.l.b16 %v46
    %v128 = vunpack.c.l.b16 %v47
    %v129 = vunpack.c.l.b16 %v48
    %v130 = vunpack.c.l.b16 %v49
    %v131 = vunpack.c.l.b16 %v50
    %v132 = vunpack.c.l.b16 %v51
    %v133 = vunpack.c.l.b16 %v52
    %v134 = vunpack.c.l.b16 %v53
    %v135 = vunpack.c.l.b16 %v54
    %v136 = vunpack.c.l.b16 %v55
    %v137 = vunpack.c.l.b16 %v56
    %v138 = vunpack.c.l.b16 %v57
    %v139 = vunpack.c.l.b16 %v58
    %v140 = vunpack.c.l.b16 %v59
    %v141 = vunpack.c.l.b16 %v60
    %v142 = vunpack.c.l.b16 %v61
    %v143 = vunpack.c.l.b16 %v62
    %v144 = vunpack.c.l.b16 %v63
    %v145 = vunpack.c.l.b16 %v64
    %v146 = vunpack.c.l.b16 %v65
    %v147 = vunpack.c.l.b16 %v66
    %v148 = vunpack.c.l.b16 %v67
    %v149 = vunpack.c.l.b16 %v68
    %v150 = vunpack.c.l.b16 %v69
    %v151 = vunpack.c.l.b16 %v70
    %v152 = vunpack.c.l.b16 %v71
    %v153 = vunpack.c.l.b16 %v72
    %v154 = vunpack.c.l.b16 %v73
    %v155 = vunpack.c.l.b16 %v74
    %v156 = vunpack.c.l.b16 %v75
    %v157 = vunpack.c.l.b16 %v76
    %v158 = vunpack.c.l.b16 %v77
    %v159 = vpack.c.b16 %v128, %v127
    %v160 = vpack.c.b16 %v130, %v129
    %v161 = vpack.c.b16 %v132, %v131
    %v162 = vpack.c.b16 %v134, %v133
    %v163 = vpack.c.b16 %v136, %v135
    %v164 = vpack.c.b16 %v138, %v137
    %v165 = vpack.c.b16 %v140, %v139
    %v166 = vpack.c.b16 %v142, %v141
    %v167 = vpack.c.b16 %v144, %v143
    %v168 = vpack.c.b16 %v146, %v145
    %v169 = vpack.c.b16 %v148, %v147
    %v170 = vpack.c.b16 %v150, %v149
    %v171 = vpack.c.b16 %v152, %v151
    %v172 = vpack.c.b16 %v154, %v153
    %v173 = vpack.c.b16 %v156, %v155
    %v174 = vpack.c.b16 %v158, %v157
    %191 = vmatprep.subr.bf16.mxu0 0
    %192 = vmatpush1.bf16.msra.mxu0 %v159
    %193 = vmatprep.subr.bf16.mxu0 0
    %194 = vmatpush1.bf16.msra.mxu0 %v160
    %195 = vmatprep.subr.bf16.mxu0 0
    %196 = vmatpush1.bf16.msra.mxu0 %v161
    %197 = vmatprep.subr.bf16.mxu0 0
    %198 = vmatpush1.bf16.msra.mxu0 %v162
    %199 = vmatprep.subr.bf16.mxu0 0
    %200 = vmatpush1.bf16.msra.mxu0 %v163
    %201 = vmatprep.subr.bf16.mxu0 0
    %202 = vmatpush1.bf16.msra.mxu0 %v164
    %203 = vmatprep.subr.bf16.mxu0 0
    %204 = vmatpush1.bf16.msra.mxu0 %v165
    %205 = vmatprep.subr.bf16.mxu0 0
    %206 = vmatpush1.bf16.msra.mxu0 %v166
    %207 = vmatprep.subr.bf16.mxu0 0
    %208 = vmatpush1.bf16.msra.mxu0 %v167
    %209 = vmatprep.subr.bf16.mxu0 0
    %210 = vmatpush1.bf16.msra.mxu0 %v168
    %211 = vmatprep.subr.bf16.mxu0 0
    %212 = vmatpush1.bf16.msra.mxu0 %v169
    %213 = vmatprep.subr.bf16.mxu0 0
    %214 = vmatpush1.bf16.msra.mxu0 %v170
    %215 = vmatprep.subr.bf16.mxu0 0
    %216 = vmatpush1.bf16.msra.mxu0 %v171
    %217 = vmatprep.subr.bf16.mxu0 0
    %218 = vmatpush1.bf16.msra.mxu0 %v172
    %219 = vmatprep.subr.bf16.mxu0 0
    %220 = vmatpush1.bf16.msra.mxu0 %v173
    %221 = vmatprep.subr.bf16.mxu0 0
    %222 = vmatpush1.bf16.msra.mxu0 %v174
    %223 = vmatprep.mubr.bf16.mxu0 %v92
    %224 = vmatmul.mubr.bf16.gmra.mrb[0].mxu0 %v91
    %v225 = vpop.f32.mrb[0].mxu0
    %v226 = vadd.f32 %v83, %v225
    %v227 = vpop.f32.mrb[0].mxu0
    %v228 = vpop.f32.mrb[0].mxu0
    %v229 = vadd.f32 %v83, %v228
    %v230 = vpop.f32.mrb[0].mxu0
    %231 = vdwg.mxu0
    %v232 = vmul.f32 %v226, 0.5
    %v233 = vmul.f32 %v229, 0.5
    %234 = vst [vmem:[#allocation7] sm:$0xff] %v232
    %235 = vst [vmem:[#allocation7 + $0x8] sm:$0xff] %v233
    // Predicated region
    $region22: #{tpu_custom_call.1} parent=1 // pred_check
      _
    $region23: #{tpu_custom_call.1} parent=1 // pred_check_branch
      %237 = sbr.rel (0) target = $region25
    $region24: #{tpu_custom_call.1} parent=1 // pred_region
      %s239 = ssub.s32 256, 256
      %240 = vsyncadd [#allocation4], %s239
      %s241 = sshll.u32 [#allocation7], 4
      %s242 = int_to_ptr.vmem [resolvable:$true] %s241
      %247 = dma.vmem_to_hbm [thread:$0]  %s242, 256, %s3, [#allocation4], 128, 128, 8
    $region25: #{tpu_custom_call.1} parent=1 // pred_fallthru
      _
    // Predicated region
    $region26: #{tpu_custom_call.1} parent=1 // pred_check
      _
    $region27: #{tpu_custom_call.1} parent=1 // pred_check_branch
      %249 = sbr.rel (0) target = $region29
    $region28: #{tpu_custom_call.1} parent=1 // pred_region
      %250 = dma.done [#allocation4], 256
    $region29: #{tpu_custom_call.1} parent=1 // pred_fallthru
      _
    %251 = vsyncpa [#allocation3], 1
    %252 = vsyncpa [#allocation6], 1
    %253 = vsyncpa [#allocation4], 1

</llo_original>
